<compile_context>
chip_gen: v5e
topology: v5e:2x2
jax: 0.10.0
libtpu: 0.0.40
codegen_flags: <defaults>
</compile_context>

<pallas_src>
import functools
import math

import jax
import jax.numpy as jnp
from jax.experimental import pallas as pl
from jax.experimental.pallas import tpu as pltpu


_INV_SQRT2 = 1.0 / math.sqrt(2.0)
_TANH_GELU_C = math.sqrt(2.0 / math.pi)


def _round_up(x, m):
    return (x + m - 1) // m * m


def _ffn_kernel(x_ref, w_in_ref, b_in_ref, w_out_ref, b_out_ref, o_ref, *,
                use_tanh_gelu):
    # Cast activation to the matmul operand dtype in-register (no HBM copy).
    x = x_ref[...].astype(w_in_ref.dtype)                     # (tm, H_p)
    # Linear 1 (MXU), f32 accumulation.
    h = jnp.dot(x, w_in_ref[...], preferred_element_type=jnp.float32)
    h = h + b_in_ref[...]                                     # (tm, F_p), f32
    if use_tanh_gelu:
        # tanh-approx GELU: transcendental on the EUP slot (VALU relief).
        h = 0.5 * h * (1.0 + jnp.tanh(_TANH_GELU_C * (h + 0.044715 * h * h * h)))
    else:
        # Exact erf GELU (matches torch.nn.GELU default), f32.
        h = 0.5 * h * (1.0 + jax.lax.erf(h * _INV_SQRT2))
    # Linear 2 (MXU), f32 accumulation.
    o = jnp.dot(h.astype(w_out_ref.dtype), w_out_ref[...],
                preferred_element_type=jnp.float32)
    o_ref[...] = (o + b_out_ref[...]).astype(o_ref.dtype)     # (tm, H_p)


def prepare_ffn_params(w_in, b_in, w_out, b_out, *, compute_dtype=jnp.bfloat16):
    """One-time parameter prep: transpose, pad feature dims to lane-dense
    multiples of 128, cast matmul operands to `compute_dtype`.

    w_in:  (num_ff, num_hidden)  (PyTorch Linear layout)
    b_in:  (num_ff,)
    w_out: (num_hidden, num_ff)
    b_out: (num_hidden,)

    compute_dtype=bfloat16 (default) runs the MXU at full rate on all chip
    generations; pass float32 for exact parity with the f32 PyTorch module.
    """
    num_ff, num_hidden = w_in.shape
    H_p = _round_up(num_hidden, 128)
    F_p = _round_up(num_ff, 128)

    w_in_t = jnp.zeros((H_p, F_p), compute_dtype)
    w_in_t = w_in_t.at[:num_hidden, :num_ff].set(
        jnp.transpose(w_in).astype(compute_dtype))
    w_out_t = jnp.zeros((F_p, H_p), compute_dtype)
    w_out_t = w_out_t.at[:num_ff, :num_hidden].set(
        jnp.transpose(w_out).astype(compute_dtype))

    # Biases stay f32 (added to the f32 accumulator). Padded tail columns are
    # inert: bias 0 -> GELU(0)=0, and the padded W_out rows are zero.
    b_in_p = jnp.zeros((1, F_p), jnp.float32).at[0, :num_ff].set(
        b_in.astype(jnp.float32))
    b_out_p = jnp.zeros((1, H_p), jnp.float32).at[0, :num_hidden].set(
        b_out.astype(jnp.float32))

    return dict(w_in_t=w_in_t, b_in=b_in_p, w_out_t=w_out_t, b_out=b_out_p,
                num_hidden=num_hidden, num_ff=num_ff,
                compute_dtype=compute_dtype)


def position_wise_feed_forward(h_V, params, *, tm=512, gelu="exact",
                               out_dtype=None):
    """h_V: (..., num_hidden). `params` from prepare_ffn_params.

    gelu: "exact" (erf, torch default) or "tanh" (EUP-friendly approximation,
          ~1e-3 deviation from exact).
    out_dtype: output dtype (defaults to h_V.dtype); pass bf16 if downstream
          consumers accept it to halve output HBM writes.
    """
    orig_shape = h_V.shape
    H = params["num_hidden"]
    assert orig_shape[-1] == H, "last dim must equal num_hidden"
    assert gelu in ("exact", "tanh")

    w_in_t = params["w_in_t"]
    w_out_t = params["w_out_t"]
    b_in_p = params["b_in"]
    b_out_p = params["b_out"]
    H_p, F_p = w_in_t.shape
    out_dtype = h_V.dtype if out_dtype is None else out_dtype

    x = h_V.reshape(-1, H)
    M = x.shape[0]

    # Row tile: big (default 512), never bigger than the (8-aligned) row
    # count. Ragged M is handled by Pallas partial-block masking (rows are
    # independent; partial output stores are masked).
    tm_eff = min(int(tm), _round_up(M, 8))
    tm_eff = max(_round_up(tm_eff, 8), 8)
    # Megacore: if one tile would cover a large M, split so both v7x
    # TensorCores get grid steps.
    if M > 256 and pl.cdiv(M, tm_eff) < 2:
        tm_eff = _round_up(pl.cdiv(M, 2), 8)
    grid = (pl.cdiv(M, tm_eff),)

    # Only pad the feature dim when it is not already lane-dense (real
    # ProteinMPNN sizes H=128, F=512 take the no-copy path).
    if H == H_p:
        x_in = x
    else:
        x_in = jnp.zeros((M, H_p), x.dtype).at[:, :H].set(x)

    kernel = functools.partial(_ffn_kernel, use_tanh_gelu=(gelu == "tanh"))

    out = pl.pallas_call(
        kernel,
        out_shape=jax.ShapeDtypeStruct((M, H_p), out_dtype),
        grid_spec=pltpu.PrefetchScalarGridSpec(
            num_scalar_prefetch=0,
            grid=grid,
            in_specs=[
                pl.BlockSpec((tm_eff, H_p), lambda i: (i, 0)),
                pl.BlockSpec((H_p, F_p), lambda i: (0, 0)),
                pl.BlockSpec((1, F_p), lambda i: (0, 0)),
                pl.BlockSpec((F_p, H_p), lambda i: (0, 0)),
                pl.BlockSpec((1, H_p), lambda i: (0, 0)),
            ],
            out_specs=pl.BlockSpec((tm_eff, H_p), lambda i: (i, 0)),
        ),
        compiler_params=pltpu.CompilerParams(
            dimension_semantics=("parallel",),
            vmem_limit_bytes=32 * 1024 * 1024,
        ),
    )(x_in, w_in_t, b_in_p, w_out_t, b_out_p)

    if H != H_p:
        out = out[:, :H]
    return out.reshape(orig_shape)


def _reference(h_V, w_in, b_in, w_out, b_out):
    h = h_V.astype(jnp.float32) @ w_in.T.astype(jnp.float32) + b_in
    h = 0.5 * h * (1.0 + jax.lax.erf(h * _INV_SQRT2))
    return h @ w_out.T.astype(jnp.float32) + b_out


def _make_params(key, num_hidden, num_ff):
    k_wi, k_bi, k_wo, k_bo = jax.random.split(key, 4)
    bound_in = 1.0 / math.sqrt(num_hidden)
    bound_out = 1.0 / math.sqrt(num_ff)
    w_in = jax.random.uniform(k_wi, (num_ff, num_hidden), jnp.float32,
                              -bound_in, bound_in)
    b_in = jax.random.uniform(k_bi, (num_ff,), jnp.float32,
                              -bound_in, bound_in)
    w_out = jax.random.uniform(k_wo, (num_hidden, num_ff), jnp.float32,
                               -bound_out, bound_out)
    b_out = jax.random.uniform(k_bo, (num_ff,) if False else (num_hidden,),
                               jnp.float32, -bound_out, bound_out)
    return w_in, b_in, w_out, b_out


if __name__ == "__main__":
    root = jax.random.PRNGKey(0)
    k1, k2, kx1, kx2 = jax.random.split(root, 4)

    # Case 1: real ProteinMPNN sizes (lane-dense, no-copy activation path),
    # f32 operands + exact erf GELU for tight parity; ragged row count
    # (M = 26) exercises the partial-last-block masking.
    num_hidden, num_ff = 128, 512
    batch, seq = 2, 13
    w_in, b_in, w_out, b_out = _make_params(k1, num_hidden, num_ff)
    h_V = jax.random.normal(kx1, (batch, seq, num_hidden), jnp.float32)

    params_f32 = prepare_ffn_params(w_in, b_in, w_out, b_out,
                                    compute_dtype=jnp.float32)
    out = jax.block_until_ready(position_wise_feed_forward(h_V, params_f32))
    ref = _reference(h_V, w_in, b_in, w_out, b_out)
    assert out.shape == h_V.shape
    assert jnp.allclose(out, ref, atol=1e-5, rtol=1e-5), "f32/exact mismatch"

    # Case 2: small non-aligned sizes (exercises feature padding to 128) with
    # the default bf16 operands + f32 accumulation and the EUP-friendly tanh
    # GELU (looser tolerance, as expected).
    num_hidden2, num_ff2 = 32, 64
    batch2, seq2 = 2, 8
    w_in2, b_in2, w_out2, b_out2 = _make_params(k2, num_hidden2, num_ff2)
    h_V2 = jax.random.normal(kx2, (batch2, seq2, num_hidden2), jnp.float32)

    params_bf16 = prepare_ffn_params(w_in2, b_in2, w_out2, b_out2)  # bf16
    out2 = jax.block_until_ready(
        position_wise_feed_forward(h_V2, params_bf16, gelu="tanh"))
    ref2 = _reference(h_V2, w_in2, b_in2, w_out2, b_out2)
    assert out2.shape == h_V2.shape
    assert jnp.allclose(out2, ref2, atol=5e-2, rtol=5e-2), "bf16/tanh mismatch"

    print("KERNEL_OK")
</pallas_src>

<mosaic_0001>
module attributes {stable_mosaic.version = 11 : i64} {
  func.func @_ffn_kernel(%arg0: i32, %arg1: memref<32x128xf32, #tpu.memory_space<vmem>>, %arg2: memref<128x512xf32, #tpu.memory_space<vmem>>, %arg3: memref<1x512xf32, #tpu.memory_space<vmem>>, %arg4: memref<512x128xf32, #tpu.memory_space<vmem>>, %arg5: memref<1x128xf32, #tpu.memory_space<vmem>>, %arg6: memref<32x128xf32, #tpu.memory_space<vmem>>) attributes {dimension_semantics = [#tpu.dimension_semantics<parallel>], iteration_bounds = array<i64: 1>, scalar_prefetch = 0 : i64, scratch_operands = 0 : i64, tpu.core_type = #tpu.core_type<tc>, window_params = [{transform_indices = @transform_0, window_bounds = array<i64: 32, 128>}, {pipeline_mode = #tpu.pipeline_mode<synchronous>, transform_indices = @transform_1, window_bounds = array<i64: 128, 512>}, {pipeline_mode = #tpu.pipeline_mode<synchronous>, transform_indices = @transform_2, window_bounds = array<i64: 1, 512>}, {pipeline_mode = #tpu.pipeline_mode<synchronous>, transform_indices = @transform_3, window_bounds = array<i64: 512, 128>}, {pipeline_mode = #tpu.pipeline_mode<synchronous>, transform_indices = @transform_4, window_bounds = array<i64: 1, 128>}, {transform_indices = @transform_5, window_bounds = array<i64: 32, 128>}]} {
    %c0 = arith.constant 0 : index
    %c0_0 = arith.constant 0 : index
    %0 = vector.load %arg1[%c0, %c0_0] : memref<32x128xf32, #tpu.memory_space<vmem>>, vector<32x128xf32>
    %c0_1 = arith.constant 0 : index
    %c0_2 = arith.constant 0 : index
    %1 = vector.load %arg2[%c0_1, %c0_2] : memref<128x512xf32, #tpu.memory_space<vmem>>, vector<128x512xf32>
    %cst = arith.constant dense<0.000000e+00> : vector<32x512xf32>
    %2 = tpu.matmul %0, %1, %cst {dimension_numbers = #tpu.dot_dimension_numbers<[1], [0], [0], [1], [0, 0, 1, 1], [], []>} : vector<32x128xf32>, vector<128x512xf32>, vector<32x512xf32> -> vector<32x512xf32>
    %c0_3 = arith.constant 0 : index
    %c0_4 = arith.constant 0 : index
    %3 = vector.load %arg3[%c0_3, %c0_4] : memref<1x512xf32, #tpu.memory_space<vmem>>, vector<1x512xf32>
    %4 = vector.broadcast %3 : vector<1x512xf32> to vector<32x512xf32>
    %5 = arith.addf %2, %4 : vector<32x512xf32>
    %cst_5 = arith.constant 5.000000e-01 : f32
    %6 = vector.broadcast %cst_5 : f32 to vector<32x512xf32>
    %7 = arith.mulf %6, %5 : vector<32x512xf32>
    %cst_6 = arith.constant 0.707106769 : f32
    %8 = vector.broadcast %cst_6 : f32 to vector<32x512xf32>
    %9 = arith.mulf %5, %8 : vector<32x512xf32>
    %10 = math.erf %9 : vector<32x512xf32>
    %cst_7 = arith.constant 1.000000e+00 : f32
    %11 = vector.broadcast %cst_7 : f32 to vector<32x512xf32>
    %12 = arith.addf %11, %10 : vector<32x512xf32>
    %13 = arith.mulf %7, %12 : vector<32x512xf32>
    %c0_8 = arith.constant 0 : index
    %c0_9 = arith.constant 0 : index
    %14 = vector.load %arg4[%c0_8, %c0_9] : memref<512x128xf32, #tpu.memory_space<vmem>>, vector<512x128xf32>
    %cst_10 = arith.constant dense<0.000000e+00> : vector<32x128xf32>
    %15 = tpu.matmul %13, %14, %cst_10 {dimension_numbers = #tpu.dot_dimension_numbers<[1], [0], [0], [1], [0, 0, 1, 1], [], []>} : vector<32x512xf32>, vector<512x128xf32>, vector<32x128xf32> -> vector<32x128xf32>
    %c0_11 = arith.constant 0 : index
    %c0_12 = arith.constant 0 : index
    %16 = vector.load %arg5[%c0_11, %c0_12] : memref<1x128xf32, #tpu.memory_space<vmem>>, vector<1x128xf32>
    %17 = vector.broadcast %16 : vector<1x128xf32> to vector<32x128xf32>
    %18 = arith.addf %15, %17 : vector<32x128xf32>
    %c0_13 = arith.constant 0 : index
    %c0_14 = arith.constant 0 : index
    %19 = vector.load %arg6[%c0_13, %c0_14] : memref<32x128xf32, #tpu.memory_space<vmem>>, vector<32x128xf32>
    tpu.vector_store %arg6[%c0_13, %c0_14], %18 {strides = array<i32>} : memref<32x128xf32, #tpu.memory_space<vmem>>, vector<32x128xf32>,
    return
  }
  func.func @transform_0(%arg0: i32) -> (i32, i32) {
    %c0_i32 = arith.constant 0 : i32
    %c0_i32_0 = arith.constant 0 : i32
    return %arg0, %c0_i32 : i32, i32
  }
  func.func @transform_1(%arg0: i32) -> (i32, i32) {
    %c0_i32 = arith.constant 0 : i32
    %c0_i32_0 = arith.constant 0 : i32
    %c0_i32_1 = arith.constant 0 : i32
    return %c0_i32, %c0_i32_0 : i32, i32
  }
  func.func @transform_2(%arg0: i32) -> (i32, i32) {
    %c0_i32 = arith.constant 0 : i32
    %c0_i32_0 = arith.constant 0 : i32
    %c0_i32_1 = arith.constant 0 : i32
    return %c0_i32, %c0_i32_0 : i32, i32
  }
  func.func @transform_3(%arg0: i32) -> (i32, i32) {
    %c0_i32 = arith.constant 0 : i32
    %c0_i32_0 = arith.constant 0 : i32
    %c0_i32_1 = arith.constant 0 : i32
    return %c0_i32, %c0_i32_0 : i32, i32
  }
  func.func @transform_4(%arg0: i32) -> (i32, i32) {
    %c0_i32 = arith.constant 0 : i32
    %c0_i32_0 = arith.constant 0 : i32
    %c0_i32_1 = arith.constant 0 : i32
    return %c0_i32, %c0_i32_0 : i32, i32
  }
  func.func @transform_5(%arg0: i32) -> (i32, i32) {
    %c0_i32 = arith.constant 0 : i32
    %c0_i32_0 = arith.constant 0 : i32
    return %arg0, %c0_i32 : i32, i32
  }
}

</mosaic_0001>

<llo_original>
// kernel: tpu_custom_call.1
$region0: #{tpu_custom_call.1}
  #allocation0 [shape = 'u32[]', space=smem, size = 0x4, offset = 0x4, fixed_abs, tag = 'smem constant byte address 0x4 - core index']
  #allocation1 [shape = 'u32[72,128]{1,0:T(1,128)}', space=vmem, size = 0x9000, scoped, tag = 'internal scratch']
  %s0 = inlined_call_operand.hbm [shape: f32[26,128], index: 0, kind: input, shape index: {}]
  %s1 = inlined_call_operand.hbm [shape: f32[128,512], index: 1, kind: input, shape index: {}]
  %s2 = inlined_call_operand.hbm [shape: f32[1,512], index: 2, kind: input, shape index: {}]
  %s3 = inlined_call_operand.hbm [shape: f32[512,128], index: 3, kind: input, shape index: {}]
  %s4 = inlined_call_operand.vmem [shape: f32[1,128], index: 4, kind: input, shape index: {}]
  %s5 = inlined_call_operand.hbm [shape: f32[26,128], index: 5, kind: output, shape index: {}]
  %s6 = sld [smem:[#allocation0]]
  $region46: #{tpu_custom_call.1} parent=0
    _
  %s8 = ssub.s32 1, %s6
  %s9 = scalar_select 0, %s8, %s6
  $region1: #{tpu_custom_call.1} parent=0
    #allocation2 [shape = 'u8[16384]{0}', space=vmem, size = 0x4000, scoped, tag = 'input window, operand 0, single buffered']
    #allocation3 [shape = 's32[1]{0}', space=sflag, size = 0x4, scoped, tag = 'scoped memory for tpu_custom_call.1']
    #allocation4 [shape = 's32[1]{0}', space=sflag, size = 0x4, scoped, tag = 'scoped memory for tpu_custom_call.1']
    #allocation5 [shape = 'u8[262144]{0}', space=vmem, size = 0x40000, scoped, tag = 'input window, operand 1, single buffered']
    #allocation6 [shape = 's32[1]{0}', space=sflag, size = 0x4, scoped, tag = 'scoped memory for tpu_custom_call.1']
    #allocation7 [shape = 'u8[2048]{0}', space=vmem, size = 0x800, scoped, tag = 'input window, operand 2, single buffered']
    #allocation8 [shape = 'u8[262144]{0}', space=vmem, size = 0x40000, scoped, tag = 'input window, operand 3, single buffered']
    #allocation9 [shape = 's32[1]{0}', space=sflag, size = 0x4, scoped, tag = 'scoped memory for tpu_custom_call.1']
    #allocation10 [shape = 'u8[16384]{0}', space=vmem, size = 0x4000, scoped, tag = 'output window, operand 0, single buffered']
    %10 = vsyncpa [#allocation3], 0
    %11 = vsyncpa [#allocation6], 0
    %12 = vsyncpa [#allocation9], 0
    %13 = vsyncpa [#allocation4], 0
    // Predicated region
    $region2: #{tpu_custom_call.1} parent=1 // pred_check
      _
    $region3: #{tpu_custom_call.1} parent=1 // pred_check_branch
      %15 = sbr.rel (0) target = $region5
    $region4: #{tpu_custom_call.1} parent=1 // pred_region
      %17 = vsyncadd [#allocation3], 0
      %s18 = sshll.u32 %s0, 4
      %s19 = int_to_ptr.hbm [resolvable:$true] %s18
      %s20 = sshll.u32 [#allocation2], 4
      %s21 = int_to_ptr.vmem [resolvable:$true] %s20
      %26 = dma.hbm_to_vmem [thread:$0]  %s19, 512, %s21, [#allocation3], 128, 128, 8
    $region5: #{tpu_custom_call.1} parent=1 // pred_fallthru
      _
    // Predicated region
    $region6: #{tpu_custom_call.1} parent=1 // pred_check
      _
    $region7: #{tpu_custom_call.1} parent=1 // pred_check_branch
      %28 = sbr.rel (0) target = $region9
    $region8: #{tpu_custom_call.1} parent=1 // pred_region
      %30 = vsyncadd [#allocation6], 0
      %s31 = sshll.u32 %s1, 4
      %s32 = int_to_ptr.hbm [resolvable:$true] %s31
      %s33 = sshll.u32 [#allocation5], 4
      %s34 = int_to_ptr.vmem [resolvable:$true] %s33
      %39 = dma.hbm_to_vmem [thread:$0]  %s32, 8192, %s34, [#allocation6], 512, 512, 32
    $region9: #{tpu_custom_call.1} parent=1 // pred_fallthru
      _
    // Predicated region
    $region10: #{tpu_custom_call.1} parent=1 // pred_check
      _
    $region11: #{tpu_custom_call.1} parent=1 // pred_check_branch
      %41 = sbr.rel (0) target = $region13
    $region12: #{tpu_custom_call.1} parent=1 // pred_region
      %43 = vsyncadd [#allocation6], 0
      %s45 = sshll.u32 %s2, 4
      %s46 = int_to_ptr.hbm [resolvable:$true] %s45
      %s47 = sshll.u32 [#allocation7], 4
      %s48 = int_to_ptr.vmem [resolvable:$true] %s47
      %50 = dma.hbm_to_vmem [thread:$0]  %s46, 64, %s48, [#allocation6]
    $region13: #{tpu_custom_call.1} parent=1 // pred_fallthru
      _
    // Predicated region
    $region14: #{tpu_custom_call.1} parent=1 // pred_check
      _
    $region15: #{tpu_custom_call.1} parent=1 // pred_check_branch
      %52 = sbr.rel (0) target = $region17
    $region16: #{tpu_custom_call.1} parent=1 // pred_region
      %54 = vsyncadd [#allocation9], 0
      %s55 = sshll.u32 %s3, 4
      %s56 = int_to_ptr.hbm [resolvable:$true] %s55
      %s57 = sshll.u32 [#allocation8], 4
      %s58 = int_to_ptr.vmem [resolvable:$true] %s57
      %63 = dma.hbm_to_vmem [thread:$0]  %s56, 8192, %s58, [#allocation9], 128, 128, 8
    $region17: #{tpu_custom_call.1} parent=1 // pred_fallthru
      _
    // Predicated region
    $region18: #{tpu_custom_call.1} parent=1 // pred_check
      _
    $region19: #{tpu_custom_call.1} parent=1 // pred_check_branch
      %65 = sbr.rel (0) target = $region21
    $region20: #{tpu_custom_call.1} parent=1 // pred_region
      _
    $region21: #{tpu_custom_call.1} parent=1 // pred_fallthru
      _
    // Predicated region
    $region22: #{tpu_custom_call.1} parent=1 // pred_check
      _
    $region23: #{tpu_custom_call.1} parent=1 // pred_check_branch
      %67 = sbr.rel (0) target = $region25
    $region24: #{tpu_custom_call.1} parent=1 // pred_region
      %69 = dma.done [#allocation3], 512
    $region25: #{tpu_custom_call.1} parent=1 // pred_fallthru
      _
    // Predicated region
    $region26: #{tpu_custom_call.1} parent=1 // pred_check
      _
    $region27: #{tpu_custom_call.1} parent=1 // pred_check_branch
      %71 = sbr.rel (0) target = $region29
    $region28: #{tpu_custom_call.1} parent=1 // pred_region
      %73 = dma.done [#allocation6], 8192
    $region29: #{tpu_custom_call.1} parent=1 // pred_fallthru
      _
    // Predicated region
    $region30: #{tpu_custom_call.1} parent=1 // pred_check
      _
    $region31: #{tpu_custom_call.1} parent=1 // pred_check_branch
      %75 = sbr.rel (0) target = $region33
    $region32: #{tpu_custom_call.1} parent=1 // pred_region
      %77 = dma.done [#allocation6], 64
    $region33: #{tpu_custom_call.1} parent=1 // pred_fallthru
      _
    // Predicated region
    $region34: #{tpu_custom_call.1} parent=1 // pred_check
      _
    $region35: #{tpu_custom_call.1} parent=1 // pred_check_branch
      %79 = sbr.rel (0) target = $region37
    $region36: #{tpu_custom_call.1} parent=1 // pred_region
      %81 = dma.done [#allocation9], 8192
    $region37: #{tpu_custom_call.1} parent=1 // pred_fallthru
      _
    %v82 = vld [vmem:[#allocation2] sm:$0xff]
    %v83 = vld [vmem:[#allocation2 + $0x8] sm:$0xff]
    %v84 = vld [vmem:[#allocation2 + $0x10] sm:$0xff]
    %v85 = vld [vmem:[#allocation2 + $0x18] sm:$0xff]
    %v86 = vld [vmem:[#allocation5] sm:$0xff]
    %v87 = vld [vmem:[#allocation5 + $0x8] sm:$0xff]
    %v88 = vld [vmem:[#allocation5 + $0x10] sm:$0xff]
    %v89 = vld [vmem:[#allocation5 + $0x18] sm:$0xff]
    %v90 = vld [vmem:[#allocation5 + $0x20] sm:$0xff]
    %v91 = vld [vmem:[#allocation5 + $0x28] sm:$0xff]
    %v92 = vld [vmem:[#allocation5 + $0x30] sm:$0xff]
    %v93 = vld [vmem:[#allocation5 + $0x38] sm:$0xff]
    %v94 = vld [vmem:[#allocation5 + $0x40] sm:$0xff]
    %v95 = vld [vmem:[#allocation5 + $0x48] sm:$0xff]
    %v96 = vld [vmem:[#allocation5 + $0x50] sm:$0xff]
    %v97 = vld [vmem:[#allocation5 + $0x58] sm:$0xff]
    %v98 = vld [vmem:[#allocation5 + $0x60] sm:$0xff]
    %v99 = vld [vmem:[#allocation5 + $0x68] sm:$0xff]
    %v100 = vld [vmem:[#allocation5 + $0x70] sm:$0xff]
    %v101 = vld [vmem:[#allocation5 + $0x78] sm:$0xff]
    %v102 = vld [vmem:[#allocation5 + $0x80] sm:$0xff]
    %v103 = vld [vmem:[#allocation5 + $0x88] sm:$0xff]
    %v104 = vld [vmem:[#allocation5 + $0x90] sm:$0xff]
    %v105 = vld [vmem:[#allocation5 + $0x98] sm:$0xff]
    %v106 = vld [vmem:[#allocation5 + $0xa0] sm:$0xff]
    %v107 = vld [vmem:[#allocation5 + $0xa8] sm:$0xff]
    %v108 = vld [vmem:[#allocation5 + $0xb0] sm:$0xff]
    %v109 = vld [vmem:[#allocation5 + $0xb8] sm:$0xff]
    %v110 = vld [vmem:[#allocation5 + $0xc0] sm:$0xff]
    %v111 = vld [vmem:[#allocation5 + $0xc8] sm:$0xff]
    %v112 = vld [vmem:[#allocation5 + $0xd0] sm:$0xff]
    %v113 = vld [vmem:[#allocation5 + $0xd8] sm:$0xff]
    %v114 = vld [vmem:[#allocation5 + $0xe0] sm:$0xff]
    %v115 = vld [vmem:[#allocation5 + $0xe8] sm:$0xff]
    %v116 = vld [vmem:[#allocation5 + $0xf0] sm:$0xff]
    %v117 = vld [vmem:[#allocation5 + $0xf8] sm:$0xff]
    %v118 = vld [vmem:[#allocation5 + $0x100] sm:$0xff]
    %v119 = vld [vmem:[#allocation5 + $0x108] sm:$0xff]
    %v120 = vld [vmem:[#allocation5 + $0x110] sm:$0xff]
    %v121 = vld [vmem:[#allocation5 + $0x118] sm:$0xff]
    %v122 = vld [vmem:[#allocation5 + $0x120] sm:$0xff]
    %v123 = vld [vmem:[#allocation5 + $0x128] sm:$0xff]
    %v124 = vld [vmem:[#allocation5 + $0x130] sm:$0xff]
    %v125 = vld [vmem:[#allocation5 + $0x138] sm:$0xff]
    %v126 = vld [vmem:[#allocation5 + $0x140] sm:$0xff]
    %v127 = vld [vmem:[#allocation5 + $0x148] sm:$0xff]
    %v128 = vld [vmem:[#allocation5 + $0x150] sm:$0xff]
    %v129 = vld [vmem:[#allocation5 + $0x158] sm:$0xff]
    %v130 = vld [vmem:[#allocation5 + $0x160] sm:$0xff]
    %v131 = vld [vmem:[#allocation5 + $0x168] sm:$0xff]
    %v132 = vld [vmem:[#allocation5 + $0x170] sm:$0xff]
    %v133 = vld [vmem:[#allocation5 + $0x178] sm:$0xff]
    %v134 = vld [vmem:[#allocation5 + $0x180] sm:$0xff]
    %v135 = vld [vmem:[#allocation5 + $0x188] sm:$0xff]
    %v136 = vld [vmem:[#allocation5 + $0x190] sm:$0xff]
    %v137 = vld [vmem:[#allocation5 + $0x198] sm:$0xff]
    %v138 = vld [vmem:[#allocation5 + $0x1a0] sm:$0xff]
    %v139 = vld [vmem:[#allocation5 + $0x1a8] sm:$0xff]
    %v140 = vld [vmem:[#allocation5 + $0x1b0] sm:$0xff]
    %v141 = vld [vmem:[#allocation5 + $0x1b8] sm:$0xff]
    %v142 = vld [vmem:[#allocation5 + $0x1c0] sm:$0xff]
    %v143 = vld [vmem:[#allocation5 + $0x1c8] sm:$0xff]
    %v144 = vld [vmem:[#allocation5 + $0x1d0] sm:$0xff]
    %v145 = vld [vmem:[#allocation5 + $0x1d8] sm:$0xff]
    %v146 = vld [vmem:[#allocation5 + $0x1e0] sm:$0xff]
    %v147 = vld [vmem:[#allocation5 + $0x1e8] sm:$0xff]
    %v148 = vld [vmem:[#allocation5 + $0x1f0] sm:$0xff]
    %v149 = vld [vmem:[#allocation5 + $0x1f8] sm:$0xff]
    %v150 = vld [vmem:[#allocation7] sm:$0xf]
    %v152 = vperm.slane %v150, 0
    %v153 = vperm.slane %v150, 1
    %v154 = vperm.slane %v150, 2
    %v155 = vperm.slane %v150, 3
    %160 = vmatpush.msra.mxu0 %v146
    %161 = vmatpush.msra.mxu0 %v142
    %162 = vmatpush.msra.mxu0 %v138
    %163 = vmatpush.msra.mxu0 %v134
    %164 = vmatpush.msra.mxu0 %v130
    %165 = vmatpush.msra.mxu0 %v126
    %166 = vmatpush.msra.mxu0 %v122
    %167 = vmatpush.msra.mxu0 %v118
    %168 = vmatpush.msra.mxu0 %v114
    %169 = vmatpush.msra.mxu0 %v110
    %170 = vmatpush.msra.mxu0 %v106
    %171 = vmatpush.msra.mxu0 %v102
    %172 = vmatpush.msra.mxu0 %v98
    %173 = vmatpush.msra.mxu0 %v94
    %174 = vmatpush.msra.mxu0 %v90
    %175 = vmatpush.msra.mxu0 %v86
    %176 = vmatmul.f32.gmra.mxu0 %v82
    %v177 = vpop.f32.mrf.mxu0
    %v178 = vadd.f32 %v152, %v177
    %179 = vmatmul.f32.gmra.mxu0 %v83
    %v180 = vpop.f32.mrf.mxu0
    %v181 = vadd.f32 %v152, %v180
    %182 = vmatmul.f32.gmra.mxu0 %v84
    %v183 = vpop.f32.mrf.mxu0
    %v184 = vadd.f32 %v152, %v183
    %185 = vmatmul.f32.gmra.mxu0 %v85
    %v186 = vpop.f32.mrf.mxu0
    %v187 = vadd.f32 %v152, %v186
    %188 = vdwg.mxu0
    %189 = vmatpush.msra.mxu0 %v147
    %190 = vmatpush.msra.mxu0 %v143
    %191 = vmatpush.msra.mxu0 %v139
    %192 = vmatpush.msra.mxu0 %v135
    %193 = vmatpush.msra.mxu0 %v131
    %194 = vmatpush.msra.mxu0 %v127
    %195 = vmatpush.msra.mxu0 %v123
    %196 = vmatpush.msra.mxu0 %v119
    %197 = vmatpush.msra.mxu0 %v115
    %198 = vmatpush.msra.mxu0 %v111
    %199 = vmatpush.msra.mxu0 %v107
    %200 = vmatpush.msra.mxu0 %v103
    %201 = vmatpush.msra.mxu0 %v99
    %202 = vmatpush.msra.mxu0 %v95
    %203 = vmatpush.msra.mxu0 %v91
    %204 = vmatpush.msra.mxu0 %v87
    %205 = vmatmul.f32.gmra.mxu0 %v82
    %v206 = vpop.f32.mrf.mxu0
    %v207 = vadd.f32 %v153, %v206
    %208 = vmatmul.f32.gmra.mxu0 %v83
    %v209 = vpop.f32.mrf.mxu0
    %v210 = vadd.f32 %v153, %v209
    %211 = vmatmul.f32.gmra.mxu0 %v84
    %v212 = vpop.f32.mrf.mxu0
    %v213 = vadd.f32 %v153, %v212
    %214 = vmatmul.f32.gmra.mxu0 %v85
    %v215 = vpop.f32.mrf.mxu0
    %v216 = vadd.f32 %v153, %v215
    %217 = vdwg.mxu0
    %218 = vmatpush.msra.mxu0 %v148
    %219 = vmatpush.msra.mxu0 %v144
    %220 = vmatpush.msra.mxu0 %v140
    %221 = vmatpush.msra.mxu0 %v136
    %222 = vmatpush.msra.mxu0 %v132
    %223 = vmatpush.msra.mxu0 %v128
    %224 = vmatpush.msra.mxu0 %v124
    %225 = vmatpush.msra.mxu0 %v120
    %226 = vmatpush.msra.mxu0 %v116
    %227 = vmatpush.msra.mxu0 %v112
    %228 = vmatpush.msra.mxu0 %v108
    %229 = vmatpush.msra.mxu0 %v104
    %230 = vmatpush.msra.mxu0 %v100
    %231 = vmatpush.msra.mxu0 %v96
    %232 = vmatpush.msra.mxu0 %v92
    %233 = vmatpush.msra.mxu0 %v88
    %234 = vmatmul.f32.gmra.mxu0 %v82
    %v235 = vpop.f32.mrf.mxu0
    %v236 = vadd.f32 %v154, %v235
    %237 = vmatmul.f32.gmra.mxu0 %v83
    %v238 = vpop.f32.mrf.mxu0
    %v239 = vadd.f32 %v154, %v238
    %240 = vmatmul.f32.gmra.mxu0 %v84
    %v241 = vpop.f32.mrf.mxu0
    %v242 = vadd.f32 %v154, %v241
    %243 = vmatmul.f32.gmra.mxu0 %v85
    %v244 = vpop.f32.mrf.mxu0
    %v245 = vadd.f32 %v154, %v244
    %246 = vdwg.mxu0
    %247 = vmatpush.msra.mxu0 %v149
    %248 = vmatpush.msra.mxu0 %v145
    %249 = vmatpush.msra.mxu0 %v141
    %250 = vmatpush.msra.mxu0 %v137
    %251 = vmatpush.msra.mxu0 %v133
    %252 = vmatpush.msra.mxu0 %v129
    %253 = vmatpush.msra.mxu0 %v125
    %254 = vmatpush.msra.mxu0 %v121
    %255 = vmatpush.msra.mxu0 %v117
    %256 = vmatpush.msra.mxu0 %v113
    %257 = vmatpush.msra.mxu0 %v109
    %258 = vmatpush.msra.mxu0 %v105
    %259 = vmatpush.msra.mxu0 %v101
    %260 = vmatpush.msra.mxu0 %v97
    %261 = vmatpush.msra.mxu0 %v93
    %262 = vmatpush.msra.mxu0 %v89
    %263 = vmatmul.f32.gmra.mxu0 %v82
    %v264 = vpop.f32.mrf.mxu0
    %v265 = vadd.f32 %v155, %v264
    %266 = vmatmul.f32.gmra.mxu0 %v83
    %v267 = vpop.f32.mrf.mxu0
    %v268 = vadd.f32 %v155, %v267
    %269 = vmatmul.f32.gmra.mxu0 %v84
    %v270 = vpop.f32.mrf.mxu0
    %v271 = vadd.f32 %v155, %v270
    %272 = vmatmul.f32.gmra.mxu0 %v85
    %v273 = vpop.f32.mrf.mxu0
    %v274 = vadd.f32 %v155, %v273
    %275 = vdwg.mxu0
    %v276 = vmul.f32 %v178, 0.5
    %v277 = vmul.f32 %v207, 0.5
    %v278 = vmul.f32 %v236, 0.5
    %v279 = vmul.f32 %v265, 0.5
    %v280 = vmul.f32 %v181, 0.5
    %v281 = vmul.f32 %v210, 0.5
    %v282 = vmul.f32 %v239, 0.5
    %v283 = vmul.f32 %v268, 0.5
    %v284 = vmul.f32 %v184, 0.5
    %v285 = vmul.f32 %v213, 0.5
    %v286 = vmul.f32 %v242, 0.5
    %v287 = vmul.f32 %v271, 0.5
    %v288 = vmul.f32 %v187, 0.5
    %v289 = vmul.f32 %v216, 0.5
    %v290 = vmul.f32 %v245, 0.5
    %v291 = vmul.f32 %v274, 0.5
    %v292 = vmul.f32 %v178, 0.70710677
    %v293 = vmul.f32 %v207, 0.70710677
    %v294 = vmul.f32 %v236, 0.70710677
    %v295 = vmul.f32 %v265, 0.70710677
    %v296 = vmul.f32 %v181, 0.70710677
    %v297 = vmul.f32 %v210, 0.70710677
    %v298 = vmul.f32 %v239, 0.70710677
    %v299 = vmul.f32 %v268, 0.70710677
    %v300 = vmul.f32 %v184, 0.70710677
    %v301 = vmul.f32 %v213, 0.70710677
    %v302 = vmul.f32 %v242, 0.70710677
    %v303 = vmul.f32 %v271, 0.70710677
    %v304 = vmul.f32 %v187, 0.70710677
    %v305 = vmul.f32 %v216, 0.70710677
    %v306 = vmul.f32 %v245, 0.70710677
    %v307 = vmul.f32 %v274, 0.70710677
    %v308 = vmul.f32 %v292, %v292
    %v309 = vmin.f32 16.0, %v308
    %v310 = vmul.f32 %v309, 2.1237322e-06
    %v311 = vadd.f32 %v310, 0.00028619796
    %v312 = vmul.f32 %v309, %v311
    %v313 = vadd.f32 %v312, 0.0036580483
    %v314 = vmul.f32 %v309, %v313
    %v315 = vadd.f32 %v314, 0.05243302
    %v316 = vmul.f32 %v309, %v315
    %v317 = vadd.f32 %v316, 0.18741608
    %v318 = vmul.f32 %v309, %v317
    %v319 = vadd.f32 %v318, 1.1283791
    %v320 = vmul.f32 %v292, %v319
    %v321 = vmul.f32 %v309, 3.8918573e-05
    %v322 = vadd.f32 %v321, 0.001143296
    %v323 = vmul.f32 %v309, %v322
    %v324 = vadd.f32 %v323, 0.014752088
    %v325 = vmul.f32 %v309, %v324
    %v326 = vadd.f32 %v325, 0.112945676
    %v327 = vmul.f32 %v309, %v326
    %v328 = vadd.f32 %v327, 0.4994258
    %v329 = vmul.f32 %v309, %v328
    %v330 = vadd.f32 %v329, 1.0
    %v331 = vrcp.pop %v330
    %v332 = vmul.f32 %v330, %v331
    %v333 = vsub.f32 1.0, %v332
    %v334 = vmul.f32 %v331, %v333
    %v335 = vadd.f32 %v331, %v334
    %vm336 = vweird.f32 %v330
    %vm337 = vweird.f32 %v331
    %vm338 = vmor %vm336, %vm337
    %v339 = vsel %vm338, %v331, %v335
    %v340 = vand.u32 2147483647, %v330
    %vm341 = vcmp.eq.f32.partialorder %v340, 8.507059e+37
    %v342 = vand.u32 %v330, 2147483648
    %v343 = vor.u32 1.1754944e-38, %v342
    %v344 = vsel %vm341, %v343, %v339
    %v345 = vmul.f32 %v320, %v344
    %v346 = vmin.f32 %v345, 1.0
    %v347 = vmax.f32 %v346, -1.0
    %v348 = vmul.f32 %v293, %v293
    %v349 = vmin.f32 16.0, %v348
    %v350 = vmul.f32 %v349, 2.1237322e-06
    %v351 = vadd.f32 %v350, 0.00028619796
    %v352 = vmul.f32 %v349, %v351
    %v353 = vadd.f32 %v352, 0.0036580483
    %v354 = vmul.f32 %v349, %v353
    %v355 = vadd.f32 %v354, 0.05243302
    %v356 = vmul.f32 %v349, %v355
    %v357 = vadd.f32 %v356, 0.18741608
    %v358 = vmul.f32 %v349, %v357
    %v359 = vadd.f32 %v358, 1.1283791
    %v360 = vmul.f32 %v293, %v359
    %v361 = vmul.f32 %v349, 3.8918573e-05
    %v362 = vadd.f32 %v361, 0.001143296
    %v363 = vmul.f32 %v349, %v362
    %v364 = vadd.f32 %v363, 0.014752088
    %v365 = vmul.f32 %v349, %v364
    %v366 = vadd.f32 %v365, 0.112945676
    %v367 = vmul.f32 %v349, %v366
    %v368 = vadd.f32 %v367, 0.4994258
    %v369 = vmul.f32 %v349, %v368
    %v370 = vadd.f32 %v369, 1.0
    %v371 = vrcp.pop %v370
    %v372 = vmul.f32 %v370, %v371
    %v373 = vsub.f32 1.0, %v372
    %v374 = vmul.f32 %v371, %v373
    %v375 = vadd.f32 %v371, %v374
    %vm376 = vweird.f32 %v370
    %vm377 = vweird.f32 %v371
    %vm378 = vmor %vm376, %vm377
    %v379 = vsel %vm378, %v371, %v375
    %v380 = vand.u32 2147483647, %v370
    %vm381 = vcmp.eq.f32.partialorder %v380, 8.507059e+37
    %v382 = vand.u32 %v370, 2147483648
    %v383 = vor.u32 1.1754944e-38, %v382
    %v384 = vsel %vm381, %v383, %v379
    %v385 = vmul.f32 %v360, %v384
    %v386 = vmin.f32 %v385, 1.0
    %v387 = vmax.f32 %v386, -1.0
    %v388 = vmul.f32 %v294, %v294
    %v389 = vmin.f32 16.0, %v388
    %v390 = vmul.f32 %v389, 2.1237322e-06
    %v391 = vadd.f32 %v390, 0.00028619796
    %v392 = vmul.f32 %v389, %v391
    %v393 = vadd.f32 %v392, 0.0036580483
    %v394 = vmul.f32 %v389, %v393
    %v395 = vadd.f32 %v394, 0.05243302
    %v396 = vmul.f32 %v389, %v395
    %v397 = vadd.f32 %v396, 0.18741608
    %v398 = vmul.f32 %v389, %v397
    %v399 = vadd.f32 %v398, 1.1283791
    %v400 = vmul.f32 %v294, %v399
    %v401 = vmul.f32 %v389, 3.8918573e-05
    %v402 = vadd.f32 %v401, 0.001143296
    %v403 = vmul.f32 %v389, %v402
    %v404 = vadd.f32 %v403, 0.014752088
    %v405 = vmul.f32 %v389, %v404
    %v406 = vadd.f32 %v405, 0.112945676
    %v407 = vmul.f32 %v389, %v406
    %v408 = vadd.f32 %v407, 0.4994258
    %v409 = vmul.f32 %v389, %v408
    %v410 = vadd.f32 %v409, 1.0
    %v411 = vrcp.pop %v410
    %v412 = vmul.f32 %v410, %v411
    %v413 = vsub.f32 1.0, %v412
    %v414 = vmul.f32 %v411, %v413
    %v415 = vadd.f32 %v411, %v414
    %vm416 = vweird.f32 %v410
    %vm417 = vweird.f32 %v411
    %vm418 = vmor %vm416, %vm417
    %v419 = vsel %vm418, %v411, %v415
    %v420 = vand.u32 2147483647, %v410
    %vm421 = vcmp.eq.f32.partialorder %v420, 8.507059e+37
    %v422 = vand.u32 %v410, 2147483648
    %v423 = vor.u32 1.1754944e-38, %v422
    %v424 = vsel %vm421, %v423, %v419
    %v425 = vmul.f32 %v400, %v424
    %v426 = vmin.f32 %v425, 1.0
    %v427 = vmax.f32 %v426, -1.0
    %v428 = vmul.f32 %v295, %v295
    %v429 = vmin.f32 16.0, %v428
    %v430 = vmul.f32 %v429, 2.1237322e-06
    %v431 = vadd.f32 %v430, 0.00028619796
    %v432 = vmul.f32 %v429, %v431
    %v433 = vadd.f32 %v432, 0.0036580483
    %v434 = vmul.f32 %v429, %v433
    %v435 = vadd.f32 %v434, 0.05243302
    %v436 = vmul.f32 %v429, %v435
    %v437 = vadd.f32 %v436, 0.18741608
    %v438 = vmul.f32 %v429, %v437
    %v439 = vadd.f32 %v438, 1.1283791
    %v440 = vmul.f32 %v295, %v439
    %v441 = vmul.f32 %v429, 3.8918573e-05
    %v442 = vadd.f32 %v441, 0.001143296
    %v443 = vmul.f32 %v429, %v442
    %v444 = vadd.f32 %v443, 0.014752088
    %v445 = vmul.f32 %v429, %v444
    %v446 = vadd.f32 %v445, 0.112945676
    %v447 = vmul.f32 %v429, %v446
    %v448 = vadd.f32 %v447, 0.4994258
    %v449 = vmul.f32 %v429, %v448
    %v450 = vadd.f32 %v449, 1.0
    %v451 = vrcp.pop %v450
    %v452 = vmul.f32 %v450, %v451
    %v453 = vsub.f32 1.0, %v452
    %v454 = vmul.f32 %v451, %v453
    %v455 = vadd.f32 %v451, %v454
    %vm456 = vweird.f32 %v450
    %vm457 = vweird.f32 %v451
    %vm458 = vmor %vm456, %vm457
    %v459 = vsel %vm458, %v451, %v455
    %v460 = vand.u32 2147483647, %v450
    %vm461 = vcmp.eq.f32.partialorder %v460, 8.507059e+37
    %v462 = vand.u32 %v450, 2147483648
    %v463 = vor.u32 1.1754944e-38, %v462
    %v464 = vsel %vm461, %v463, %v459
    %v465 = vmul.f32 %v440, %v464
    %v466 = vmin.f32 %v465, 1.0
    %v467 = vmax.f32 %v466, -1.0
    %v468 = vmul.f32 %v296, %v296
    %v469 = vmin.f32 16.0, %v468
    %v470 = vmul.f32 %v469, 2.1237322e-06
    %v471 = vadd.f32 %v470, 0.00028619796
    %v472 = vmul.f32 %v469, %v471
    %v473 = vadd.f32 %v472, 0.0036580483
    %v474 = vmul.f32 %v469, %v473
    %v475 = vadd.f32 %v474, 0.05243302
    %v476 = vmul.f32 %v469, %v475
    %v477 = vadd.f32 %v476, 0.18741608
    %v478 = vmul.f32 %v469, %v477
    %v479 = vadd.f32 %v478, 1.1283791
    %v480 = vmul.f32 %v296, %v479
    %v481 = vmul.f32 %v469, 3.8918573e-05
    %v482 = vadd.f32 %v481, 0.001143296
    %v483 = vmul.f32 %v469, %v482
    %v484 = vadd.f32 %v483, 0.014752088
    %v485 = vmul.f32 %v469, %v484
    %v486 = vadd.f32 %v485, 0.112945676
    %v487 = vmul.f32 %v469, %v486
    %v488 = vadd.f32 %v487, 0.4994258
    %v489 = vmul.f32 %v469, %v488
    %v490 = vadd.f32 %v489, 1.0
    %v491 = vrcp.pop %v490
    %v492 = vmul.f32 %v490, %v491
    %v493 = vsub.f32 1.0, %v492
    %v494 = vmul.f32 %v491, %v493
    %v495 = vadd.f32 %v491, %v494
    %vm496 = vweird.f32 %v490
    %vm497 = vweird.f32 %v491
    %vm498 = vmor %vm496, %vm497
    %v499 = vsel %vm498, %v491, %v495
    %v500 = vand.u32 2147483647, %v490
    %vm501 = vcmp.eq.f32.partialorder %v500, 8.507059e+37
    %v502 = vand.u32 %v490, 2147483648
    %v503 = vor.u32 1.1754944e-38, %v502
    %v504 = vsel %vm501, %v503, %v499
    %v505 = vmul.f32 %v480, %v504
    %v506 = vmin.f32 %v505, 1.0
    %v507 = vmax.f32 %v506, -1.0
    %v508 = vmul.f32 %v297, %v297
    %v509 = vmin.f32 16.0, %v508
    %v510 = vmul.f32 %v509, 2.1237322e-06
    %v511 = vadd.f32 %v510, 0.00028619796
    %v512 = vmul.f32 %v509, %v511
    %v513 = vadd.f32 %v512, 0.0036580483
    %v514 = vmul.f32 %v509, %v513
    %v515 = vadd.f32 %v514, 0.05243302
    %v516 = vmul.f32 %v509, %v515
    %v517 = vadd.f32 %v516, 0.18741608
    %v518 = vmul.f32 %v509, %v517
    %v519 = vadd.f32 %v518, 1.1283791
    %v520 = vmul.f32 %v297, %v519
    %v521 = vmul.f32 %v509, 3.8918573e-05
    %v522 = vadd.f32 %v521, 0.001143296
    %v523 = vmul.f32 %v509, %v522
    %v524 = vadd.f32 %v523, 0.014752088
    %v525 = vmul.f32 %v509, %v524
    %v526 = vadd.f32 %v525, 0.112945676
    %v527 = vmul.f32 %v509, %v526
    %v528 = vadd.f32 %v527, 0.4994258
    %v529 = vmul.f32 %v509, %v528
    %v530 = vadd.f32 %v529, 1.0
    %v531 = vrcp.pop %v530
    %v532 = vmul.f32 %v530, %v531
    %v533 = vsub.f32 1.0, %v532
    %v534 = vmul.f32 %v531, %v533
    %v535 = vadd.f32 %v531, %v534
    %vm536 = vweird.f32 %v530
    %vm537 = vweird.f32 %v531
    %vm538 = vmor %vm536, %vm537
    %v539 = vsel %vm538, %v531, %v535
    %v540 = vand.u32 2147483647, %v530
    %vm541 = vcmp.eq.f32.partialorder %v540, 8.507059e+37
    %v542 = vand.u32 %v530, 2147483648
    %v543 = vor.u32 1.1754944e-38, %v542
    %v544 = vsel %vm541, %v543, %v539
    %v545 = vmul.f32 %v520, %v544
    %v546 = vmin.f32 %v545, 1.0
    %v547 = vmax.f32 %v546, -1.0
    %v548 = vmul.f32 %v298, %v298
    %v549 = vmin.f32 16.0, %v548
    %v550 = vmul.f32 %v549, 2.1237322e-06
    %v551 = vadd.f32 %v550, 0.00028619796
    %v552 = vmul.f32 %v549, %v551
    %v553 = vadd.f32 %v552, 0.0036580483
    %v554 = vmul.f32 %v549, %v553
    %v555 = vadd.f32 %v554, 0.05243302
    %v556 = vmul.f32 %v549, %v555
    %v557 = vadd.f32 %v556, 0.18741608
    %v558 = vmul.f32 %v549, %v557
    %v559 = vadd.f32 %v558, 1.1283791
    %v560 = vmul.f32 %v298, %v559
    %v561 = vmul.f32 %v549, 3.8918573e-05
    %v562 = vadd.f32 %v561, 0.001143296
    %v563 = vmul.f32 %v549, %v562
    %v564 = vadd.f32 %v563, 0.014752088
    %v565 = vmul.f32 %v549, %v564
    %v566 = vadd.f32 %v565, 0.112945676
    %v567 = vmul.f32 %v549, %v566
    %v568 = vadd.f32 %v567, 0.4994258
    %v569 = vmul.f32 %v549, %v568
    %v570 = vadd.f32 %v569, 1.0
    %v571 = vrcp.pop %v570
    %v572 = vmul.f32 %v570, %v571
    %v573 = vsub.f32 1.0, %v572
    %v574 = vmul.f32 %v571, %v573
    %v575 = vadd.f32 %v571, %v574
    %vm576 = vweird.f32 %v570
    %vm577 = vweird.f32 %v571
    %vm578 = vmor %vm576, %vm577
    %v579 = vsel %vm578, %v571, %v575
    %v580 = vand.u32 2147483647, %v570
    %vm581 = vcmp.eq.f32.partialorder %v580, 8.507059e+37
    %v582 = vand.u32 %v570, 2147483648
    %v583 = vor.u32 1.1754944e-38, %v582
    %v584 = vsel %vm581, %v583, %v579
    %v585 = vmul.f32 %v560, %v584
    %v586 = vmin.f32 %v585, 1.0
    %v587 = vmax.f32 %v586, -1.0
    %v588 = vmul.f32 %v299, %v299
    %v589 = vmin.f32 16.0, %v588
    %v590 = vmul.f32 %v589, 2.1237322e-06
    %v591 = vadd.f32 %v590, 0.00028619796
    %v592 = vmul.f32 %v589, %v591
    %v593 = vadd.f32 %v592, 0.0036580483
    %v594 = vmul.f32 %v589, %v593
    %v595 = vadd.f32 %v594, 0.05243302
    %v596 = vmul.f32 %v589, %v595
    %v597 = vadd.f32 %v596, 0.18741608
    %v598 = vmul.f32 %v589, %v597
    %v599 = vadd.f32 %v598, 1.1283791
    %v600 = vmul.f32 %v299, %v599
    %v601 = vmul.f32 %v589, 3.8918573e-05
    %v602 = vadd.f32 %v601, 0.001143296
    %v603 = vmul.f32 %v589, %v602
    %v604 = vadd.f32 %v603, 0.014752088
    %v605 = vmul.f32 %v589, %v604
    %v606 = vadd.f32 %v605, 0.112945676
    %v607 = vmul.f32 %v589, %v606
    %v608 = vadd.f32 %v607, 0.4994258
    %v609 = vmul.f32 %v589, %v608
    %v610 = vadd.f32 %v609, 1.0
    %v611 = vrcp.pop %v610
    %v612 = vmul.f32 %v610, %v611
    %v613 = vsub.f32 1.0, %v612
    %v614 = vmul.f32 %v611, %v613
    %v615 = vadd.f32 %v611, %v614
    %vm616 = vweird.f32 %v610
    %vm617 = vweird.f32 %v611
    %vm618 = vmor %vm616, %vm617
    %v619 = vsel %vm618, %v611, %v615
    %v620 = vand.u32 2147483647, %v610
    %vm621 = vcmp.eq.f32.partialorder %v620, 8.507059e+37
    %v622 = vand.u32 %v610, 2147483648
    %v623 = vor.u32 1.1754944e-38, %v622
    %v624 = vsel %vm621, %v623, %v619
    %v625 = vmul.f32 %v600, %v624
    %v626 = vmin.f32 %v625, 1.0
    %v627 = vmax.f32 %v626, -1.0
    %v628 = vmul.f32 %v300, %v300
    %v629 = vmin.f32 16.0, %v628
    %v630 = vmul.f32 %v629, 2.1237322e-06
    %v631 = vadd.f32 %v630, 0.00028619796
    %v632 = vmul.f32 %v629, %v631
    %v633 = vadd.f32 %v632, 0.0036580483
    %v634 = vmul.f32 %v629, %v633
    %v635 = vadd.f32 %v634, 0.05243302
    %v636 = vmul.f32 %v629, %v635
    %v637 = vadd.f32 %v636, 0.18741608
    %v638 = vmul.f32 %v629, %v637
    %v639 = vadd.f32 %v638, 1.1283791
    %v640 = vmul.f32 %v300, %v639
    %v641 = vmul.f32 %v629, 3.8918573e-05
    %v642 = vadd.f32 %v641, 0.001143296
    %v643 = vmul.f32 %v629, %v642
    %v644 = vadd.f32 %v643, 0.014752088
    %v645 = vmul.f32 %v629, %v644
    %v646 = vadd.f32 %v645, 0.112945676
    %v647 = vmul.f32 %v629, %v646
    %v648 = vadd.f32 %v647, 0.4994258
    %v649 = vmul.f32 %v629, %v648
    %v650 = vadd.f32 %v649, 1.0
    %v651 = vrcp.pop %v650
    %v652 = vmul.f32 %v650, %v651
    %v653 = vsub.f32 1.0, %v652
    %v654 = vmul.f32 %v651, %v653
    %v655 = vadd.f32 %v651, %v654
    %vm656 = vweird.f32 %v650
    %vm657 = vweird.f32 %v651
    %vm658 = vmor %vm656, %vm657
    %v659 = vsel %vm658, %v651, %v655
    %v660 = vand.u32 2147483647, %v650
    %vm661 = vcmp.eq.f32.partialorder %v660, 8.507059e+37
    %v662 = vand.u32 %v650, 2147483648
    %v663 = vor.u32 1.1754944e-38, %v662
    %v664 = vsel %vm661, %v663, %v659
    %v665 = vmul.f32 %v640, %v664
    %v666 = vmin.f32 %v665, 1.0
    %v667 = vmax.f32 %v666, -1.0
    %v668 = vmul.f32 %v301, %v301
    %v669 = vmin.f32 16.0, %v668
    %v670 = vmul.f32 %v669, 2.1237322e-06
    %v671 = vadd.f32 %v670, 0.00028619796
    %v672 = vmul.f32 %v669, %v671
    %v673 = vadd.f32 %v672, 0.0036580483
    %v674 = vmul.f32 %v669, %v673
    %v675 = vadd.f32 %v674, 0.05243302
    %v676 = vmul.f32 %v669, %v675
    %v677 = vadd.f32 %v676, 0.18741608
    %v678 = vmul.f32 %v669, %v677
    %v679 = vadd.f32 %v678, 1.1283791
    %v680 = vmul.f32 %v301, %v679
    %v681 = vmul.f32 %v669, 3.8918573e-05
    %v682 = vadd.f32 %v681, 0.001143296
    %v683 = vmul.f32 %v669, %v682
    %v684 = vadd.f32 %v683, 0.014752088
    %v685 = vmul.f32 %v669, %v684
    %v686 = vadd.f32 %v685, 0.112945676
    %v687 = vmul.f32 %v669, %v686
    %v688 = vadd.f32 %v687, 0.4994258
    %v689 = vmul.f32 %v669, %v688
    %v690 = vadd.f32 %v689, 1.0
    %v691 = vrcp.pop %v690
    %v692 = vmul.f32 %v690, %v691
    %v693 = vsub.f32 1.0, %v692
    %v694 = vmul.f32 %v691, %v693
    %v695 = vadd.f32 %v691, %v694
    %vm696 = vweird.f32 %v690
    %vm697 = vweird.f32 %v691
    %vm698 = vmor %vm696, %vm697
    %v699 = vsel %vm698, %v691, %v695
    %v700 = vand.u32 2147483647, %v690
    %vm701 = vcmp.eq.f32.partialorder %v700, 8.507059e+37
    %v702 = vand.u32 %v690, 2147483648
    %v703 = vor.u32 1.1754944e-38, %v702
    %v704 = vsel %vm701, %v703, %v699
    %v705 = vmul.f32 %v680, %v704
    %v706 = vmin.f32 %v705, 1.0
    %v707 = vmax.f32 %v706, -1.0
    %v708 = vmul.f32 %v302, %v302
    %v709 = vmin.f32 16.0, %v708
    %v710 = vmul.f32 %v709, 2.1237322e-06
    %v711 = vadd.f32 %v710, 0.00028619796
    %v712 = vmul.f32 %v709, %v711
    %v713 = vadd.f32 %v712, 0.0036580483
    %v714 = vmul.f32 %v709, %v713
    %v715 = vadd.f32 %v714, 0.05243302
    %v716 = vmul.f32 %v709, %v715
    %v717 = vadd.f32 %v716, 0.18741608
    %v718 = vmul.f32 %v709, %v717
    %v719 = vadd.f32 %v718, 1.1283791
    %v720 = vmul.f32 %v302, %v719
    %v721 = vmul.f32 %v709, 3.8918573e-05
    %v722 = vadd.f32 %v721, 0.001143296
    %v723 = vmul.f32 %v709, %v722
    %v724 = vadd.f32 %v723, 0.014752088
    %v725 = vmul.f32 %v709, %v724
    %v726 = vadd.f32 %v725, 0.112945676
    %v727 = vmul.f32 %v709, %v726
    %v728 = vadd.f32 %v727, 0.4994258
    %v729 = vmul.f32 %v709, %v728
    %v730 = vadd.f32 %v729, 1.0
    %v731 = vrcp.pop %v730
    %v732 = vmul.f32 %v730, %v731
    %v733 = vsub.f32 1.0, %v732
    %v734 = vmul.f32 %v731, %v733
    %v735 = vadd.f32 %v731, %v734
    %vm736 = vweird.f32 %v730
    %vm737 = vweird.f32 %v731
    %vm738 = vmor %vm736, %vm737
    %v739 = vsel %vm738, %v731, %v735
    %v740 = vand.u32 2147483647, %v730
    %vm741 = vcmp.eq.f32.partialorder %v740, 8.507059e+37
    %v742 = vand.u32 %v730, 2147483648
    %v743 = vor.u32 1.1754944e-38, %v742
    %v744 = vsel %vm741, %v743, %v739
    %v745 = vmul.f32 %v720, %v744
    %v746 = vmin.f32 %v745, 1.0
    %v747 = vmax.f32 %v746, -1.0
    %v748 = vmul.f32 %v303, %v303
    %v749 = vmin.f32 16.0, %v748
    %v750 = vmul.f32 %v749, 2.1237322e-06
    %v751 = vadd.f32 %v750, 0.00028619796
    %v752 = vmul.f32 %v749, %v751
    %v753 = vadd.f32 %v752, 0.0036580483
    %v754 = vmul.f32 %v749, %v753
    %v755 = vadd.f32 %v754, 0.05243302
    %v756 = vmul.f32 %v749, %v755
    %v757 = vadd.f32 %v756, 0.18741608
    %v758 = vmul.f32 %v749, %v757
    %v759 = vadd.f32 %v758, 1.1283791
    %v760 = vmul.f32 %v303, %v759
    %v761 = vmul.f32 %v749, 3.8918573e-05
    %v762 = vadd.f32 %v761, 0.001143296
    %v763 = vmul.f32 %v749, %v762
    %v764 = vadd.f32 %v763, 0.014752088
    %v765 = vmul.f32 %v749, %v764
    %v766 = vadd.f32 %v765, 0.112945676
    %v767 = vmul.f32 %v749, %v766
    %v768 = vadd.f32 %v767, 0.4994258
    %v769 = vmul.f32 %v749, %v768
    %v770 = vadd.f32 %v769, 1.0
    %v771 = vrcp.pop %v770
    %v772 = vmul.f32 %v770, %v771
    %v773 = vsub.f32 1.0, %v772
    %v774 = vmul.f32 %v771, %v773
    %v775 = vadd.f32 %v771, %v774
    %vm776 = vweird.f32 %v770
    %vm777 = vweird.f32 %v771
    %vm778 = vmor %vm776, %vm777
    %v779 = vsel %vm778, %v771, %v775
    %v780 = vand.u32 2147483647, %v770
    %vm781 = vcmp.eq.f32.partialorder %v780, 8.507059e+37
    %v782 = vand.u32 %v770, 2147483648
    %v783 = vor.u32 1.1754944e-38, %v782
    %v784 = vsel %vm781, %v783, %v779
    %v785 = vmul.f32 %v760, %v784
    %v786 = vmin.f32 %v785, 1.0
    %v787 = vmax.f32 %v786, -1.0
    %v788 = vmul.f32 %v304, %v304
    %v789 = vmin.f32 16.0, %v788
    %v790 = vmul.f32 %v789, 2.1237322e-06
    %v791 = vadd.f32 %v790, 0.00028619796
    %v792 = vmul.f32 %v789, %v791
    %v793 = vadd.f32 %v792, 0.0036580483
    %v794 = vmul.f32 %v789, %v793
    %v795 = vadd.f32 %v794, 0.05243302
    %v796 = vmul.f32 %v789, %v795
    %v797 = vadd.f32 %v796, 0.18741608
    %v798 = vmul.f32 %v789, %v797
    %v799 = vadd.f32 %v798, 1.1283791
    %v800 = vmul.f32 %v304, %v799
    %v801 = vmul.f32 %v789, 3.8918573e-05
    %v802 = vadd.f32 %v801, 0.001143296
    %v803 = vmul.f32 %v789, %v802
    %v804 = vadd.f32 %v803, 0.014752088
    %v805 = vmul.f32 %v789, %v804
    %v806 = vadd.f32 %v805, 0.112945676
    %v807 = vmul.f32 %v789, %v806
    %v808 = vadd.f32 %v807, 0.4994258
    %v809 = vmul.f32 %v789, %v808
    %v810 = vadd.f32 %v809, 1.0
    %v811 = vrcp.pop %v810
    %v812 = vmul.f32 %v810, %v811
    %v813 = vsub.f32 1.0, %v812
    %v814 = vmul.f32 %v811, %v813
    %v815 = vadd.f32 %v811, %v814
    %vm816 = vweird.f32 %v810
    %vm817 = vweird.f32 %v811
    %vm818 = vmor %vm816, %vm817
    %v819 = vsel %vm818, %v811, %v815
    %v820 = vand.u32 2147483647, %v810
    %vm821 = vcmp.eq.f32.partialorder %v820, 8.507059e+37
    %v822 = vand.u32 %v810, 2147483648
    %v823 = vor.u32 1.1754944e-38, %v822
    %v824 = vsel %vm821, %v823, %v819
    %v825 = vmul.f32 %v800, %v824
    %v826 = vmin.f32 %v825, 1.0
    %v827 = vmax.f32 %v826, -1.0
    %v828 = vmul.f32 %v305, %v305
    %v829 = vmin.f32 16.0, %v828
    %v830 = vmul.f32 %v829, 2.1237322e-06
    %v831 = vadd.f32 %v830, 0.00028619796
    %v832 = vmul.f32 %v829, %v831
    %v833 = vadd.f32 %v832, 0.0036580483
    %v834 = vmul.f32 %v829, %v833
    %v835 = vadd.f32 %v834, 0.05243302
    %v836 = vmul.f32 %v829, %v835
    %v837 = vadd.f32 %v836, 0.18741608
    %v838 = vmul.f32 %v829, %v837
    %v839 = vadd.f32 %v838, 1.1283791
    %v840 = vmul.f32 %v305, %v839
    %v841 = vmul.f32 %v829, 3.8918573e-05
    %v842 = vadd.f32 %v841, 0.001143296
    %v843 = vmul.f32 %v829, %v842
    %v844 = vadd.f32 %v843, 0.014752088
    %v845 = vmul.f32 %v829, %v844
    %v846 = vadd.f32 %v845, 0.112945676
    %v847 = vmul.f32 %v829, %v846
    %v848 = vadd.f32 %v847, 0.4994258
    %v849 = vmul.f32 %v829, %v848
    %v850 = vadd.f32 %v849, 1.0
    %v851 = vrcp.pop %v850
    %v852 = vmul.f32 %v850, %v851
    %v853 = vsub.f32 1.0, %v852
    %v854 = vmul.f32 %v851, %v853
    %v855 = vadd.f32 %v851, %v854
    %vm856 = vweird.f32 %v850
    %vm857 = vweird.f32 %v851
    %vm858 = vmor %vm856, %vm857
    %v859 = vsel %vm858, %v851, %v855
    %v860 = vand.u32 2147483647, %v850
    %vm861 = vcmp.eq.f32.partialorder %v860, 8.507059e+37
    %v862 = vand.u32 %v850, 2147483648
    %v863 = vor.u32 1.1754944e-38, %v862
    %v864 = vsel %vm861, %v863, %v859
    %v865 = vmul.f32 %v840, %v864
    %v866 = vmin.f32 %v865, 1.0
    %v867 = vmax.f32 %v866, -1.0
    %v868 = vmul.f32 %v306, %v306
    %v869 = vmin.f32 16.0, %v868
    %v870 = vmul.f32 %v869, 2.1237322e-06
    %v871 = vadd.f32 %v870, 0.00028619796
    %v872 = vmul.f32 %v869, %v871
    %v873 = vadd.f32 %v872, 0.0036580483
    %v874 = vmul.f32 %v869, %v873
    %v875 = vadd.f32 %v874, 0.05243302
    %v876 = vmul.f32 %v869, %v875
    %v877 = vadd.f32 %v876, 0.18741608
    %v878 = vmul.f32 %v869, %v877
    %v879 = vadd.f32 %v878, 1.1283791
    %v880 = vmul.f32 %v306, %v879
    %v881 = vmul.f32 %v869, 3.8918573e-05
    %v882 = vadd.f32 %v881, 0.001143296
    %v883 = vmul.f32 %v869, %v882
    %v884 = vadd.f32 %v883, 0.014752088
    %v885 = vmul.f32 %v869, %v884
    %v886 = vadd.f32 %v885, 0.112945676
    %v887 = vmul.f32 %v869, %v886
    %v888 = vadd.f32 %v887, 0.4994258
    %v889 = vmul.f32 %v869, %v888
    %v890 = vadd.f32 %v889, 1.0
    %v891 = vrcp.pop %v890
    %v892 = vmul.f32 %v890, %v891
    %v893 = vsub.f32 1.0, %v892
    %v894 = vmul.f32 %v891, %v893
    %v895 = vadd.f32 %v891, %v894
    %vm896 = vweird.f32 %v890
    %vm897 = vweird.f32 %v891
    %vm898 = vmor %vm896, %vm897
    %v899 = vsel %vm898, %v891, %v895
    %v900 = vand.u32 2147483647, %v890
    %vm901 = vcmp.eq.f32.partialorder %v900, 8.507059e+37
    %v902 = vand.u32 %v890, 2147483648
    %v903 = vor.u32 1.1754944e-38, %v902
    %v904 = vsel %vm901, %v903, %v899
    %v905 = vmul.f32 %v880, %v904
    %v906 = vmin.f32 %v905, 1.0
    %v907 = vmax.f32 %v906, -1.0
    %v908 = vmul.f32 %v307, %v307
    %v909 = vmin.f32 16.0, %v908
    %v910 = vmul.f32 %v909, 2.1237322e-06
    %v911 = vadd.f32 %v910, 0.00028619796
    %v912 = vmul.f32 %v909, %v911
    %v913 = vadd.f32 %v912, 0.0036580483
    %v914 = vmul.f32 %v909, %v913
    %v915 = vadd.f32 %v914, 0.05243302
    %v916 = vmul.f32 %v909, %v915
    %v917 = vadd.f32 %v916, 0.18741608
    %v918 = vmul.f32 %v909, %v917
    %v919 = vadd.f32 %v918, 1.1283791
    %v920 = vmul.f32 %v307, %v919
    %v921 = vmul.f32 %v909, 3.8918573e-05
    %v922 = vadd.f32 %v921, 0.001143296
    %v923 = vmul.f32 %v909, %v922
    %v924 = vadd.f32 %v923, 0.014752088
    %v925 = vmul.f32 %v909, %v924
    %v926 = vadd.f32 %v925, 0.112945676
    %v927 = vmul.f32 %v909, %v926
    %v928 = vadd.f32 %v927, 0.4994258
    %v929 = vmul.f32 %v909, %v928
    %v930 = vadd.f32 %v929, 1.0
    %v931 = vrcp.pop %v930
    %v932 = vmul.f32 %v930, %v931
    %v933 = vsub.f32 1.0, %v932
    %v934 = vmul.f32 %v931, %v933
    %v935 = vadd.f32 %v931, %v934
    %vm936 = vweird.f32 %v930
    %vm937 = vweird.f32 %v931
    %vm938 = vmor %vm936, %vm937
    %v939 = vsel %vm938, %v931, %v935
    %v940 = vand.u32 2147483647, %v930
    %vm941 = vcmp.eq.f32.partialorder %v940, 8.507059e+37
    %v942 = vand.u32 %v930, 2147483648
    %v943 = vor.u32 1.1754944e-38, %v942
    %v944 = vsel %vm941, %v943, %v939
    %v945 = vmul.f32 %v920, %v944
    %v946 = vmin.f32 %v945, 1.0
    %v947 = vmax.f32 %v946, -1.0
    %v948 = vadd.f32 %v347, 1.0
    %v949 = vadd.f32 %v387, 1.0
    %v950 = vadd.f32 %v427, 1.0
    %v951 = vadd.f32 %v467, 1.0
    %v952 = vadd.f32 %v507, 1.0
    %v953 = vadd.f32 %v547, 1.0
    %v954 = vadd.f32 %v587, 1.0
    %v955 = vadd.f32 %v627, 1.0
    %v956 = vadd.f32 %v667, 1.0
    %v957 = vadd.f32 %v707, 1.0
    %v958 = vadd.f32 %v747, 1.0
    %v959 = vadd.f32 %v787, 1.0
    %v960 = vadd.f32 %v827, 1.0
    %v961 = vadd.f32 %v867, 1.0
    %v962 = vadd.f32 %v907, 1.0
    %v963 = vadd.f32 %v947, 1.0
    %v964 = vmul.f32 %v276, %v948
    %v965 = vmul.f32 %v277, %v949
    %v966 = vmul.f32 %v278, %v950
    %v967 = vmul.f32 %v279, %v951
    %v968 = vmul.f32 %v280, %v952
    %v969 = vmul.f32 %v281, %v953
    %v970 = vmul.f32 %v282, %v954
    %v971 = vmul.f32 %v283, %v955
    %v972 = vmul.f32 %v284, %v956
    %v973 = vmul.f32 %v285, %v957
    %v974 = vmul.f32 %v286, %v958
    %v975 = vmul.f32 %v287, %v959
    %v976 = vmul.f32 %v288, %v960
    %v977 = vmul.f32 %v289, %v961
    %v978 = vmul.f32 %v290, %v962
    %v979 = vmul.f32 %v291, %v963
    %v980 = vld [vmem:[#allocation8] sm:$0xff]
    %v981 = vld [vmem:[#allocation8 + $0x8] sm:$0xff]
    %v982 = vld [vmem:[#allocation8 + $0x10] sm:$0xff]
    %v983 = vld [vmem:[#allocation8 + $0x18] sm:$0xff]
    %v984 = vld [vmem:[#allocation8 + $0x20] sm:$0xff]
    %v985 = vld [vmem:[#allocation8 + $0x28] sm:$0xff]
    %v986 = vld [vmem:[#allocation8 + $0x30] sm:$0xff]
    %v987 = vld [vmem:[#allocation8 + $0x38] sm:$0xff]
    %v988 = vld [vmem:[#allocation8 + $0x40] sm:$0xff]
    %v989 = vld [vmem:[#allocation8 + $0x48] sm:$0xff]
    %v990 = vld [vmem:[#allocation8 + $0x50] sm:$0xff]
    %v991 = vld [vmem:[#allocation8 + $0x58] sm:$0xff]
    %v992 = vld [vmem:[#allocation8 + $0x60] sm:$0xff]
    %v993 = vld [vmem:[#allocation8 + $0x68] sm:$0xff]
    %v994 = vld [vmem:[#allocation8 + $0x70] sm:$0xff]
    %v995 = vld [vmem:[#allocation8 + $0x78] sm:$0xff]
    %v996 = vld [vmem:[#allocation8 + $0x80] sm:$0xff]
    %v997 = vld [vmem:[#allocation8 + $0x88] sm:$0xff]
    %v998 = vld [vmem:[#allocation8 + $0x90] sm:$0xff]
    %v999 = vld [vmem:[#allocation8 + $0x98] sm:$0xff]
    %v1000 = vld [vmem:[#allocation8 + $0xa0] sm:$0xff]
    %v1001 = vld [vmem:[#allocation8 + $0xa8] sm:$0xff]
    %v1002 = vld [vmem:[#allocation8 + $0xb0] sm:$0xff]
    %v1003 = vld [vmem:[#allocation8 + $0xb8] sm:$0xff]
    %v1004 = vld [vmem:[#allocation8 + $0xc0] sm:$0xff]
    %v1005 = vld [vmem:[#allocation8 + $0xc8] sm:$0xff]
    %v1006 = vld [vmem:[#allocation8 + $0xd0] sm:$0xff]
    %v1007 = vld [vmem:[#allocation8 + $0xd8] sm:$0xff]
    %v1008 = vld [vmem:[#allocation8 + $0xe0] sm:$0xff]
    %v1009 = vld [vmem:[#allocation8 + $0xe8] sm:$0xff]
    %v1010 = vld [vmem:[#allocation8 + $0xf0] sm:$0xff]
    %v1011 = vld [vmem:[#allocation8 + $0xf8] sm:$0xff]
    %v1012 = vld [vmem:[#allocation8 + $0x100] sm:$0xff]
    %v1013 = vld [vmem:[#allocation8 + $0x108] sm:$0xff]
    %v1014 = vld [vmem:[#allocation8 + $0x110] sm:$0xff]
    %v1015 = vld [vmem:[#allocation8 + $0x118] sm:$0xff]
    %v1016 = vld [vmem:[#allocation8 + $0x120] sm:$0xff]
    %v1017 = vld [vmem:[#allocation8 + $0x128] sm:$0xff]
    %v1018 = vld [vmem:[#allocation8 + $0x130] sm:$0xff]
    %v1019 = vld [vmem:[#allocation8 + $0x138] sm:$0xff]
    %v1020 = vld [vmem:[#allocation8 + $0x140] sm:$0xff]
    %v1021 = vld [vmem:[#allocation8 + $0x148] sm:$0xff]
    %v1022 = vld [vmem:[#allocation8 + $0x150] sm:$0xff]
    %v1023 = vld [vmem:[#allocation8 + $0x158] sm:$0xff]
    %v1024 = vld [vmem:[#allocation8 + $0x160] sm:$0xff]
    %v1025 = vld [vmem:[#allocation8 + $0x168] sm:$0xff]
    %v1026 = vld [vmem:[#allocation8 + $0x170] sm:$0xff]
    %v1027 = vld [vmem:[#allocation8 + $0x178] sm:$0xff]
    %v1028 = vld [vmem:[#allocation8 + $0x180] sm:$0xff]
    %v1029 = vld [vmem:[#allocation8 + $0x188] sm:$0xff]
    %v1030 = vld [vmem:[#allocation8 + $0x190] sm:$0xff]
    %v1031 = vld [vmem:[#allocation8 + $0x198] sm:$0xff]
    %v1032 = vld [vmem:[#allocation8 + $0x1a0] sm:$0xff]
    %v1033 = vld [vmem:[#allocation8 + $0x1a8] sm:$0xff]
    %v1034 = vld [vmem:[#allocation8 + $0x1b0] sm:$0xff]
    %v1035 = vld [vmem:[#allocation8 + $0x1b8] sm:$0xff]
    %v1036 = vld [vmem:[#allocation8 + $0x1c0] sm:$0xff]
    %v1037 = vld [vmem:[#allocation8 + $0x1c8] sm:$0xff]
    %v1038 = vld [vmem:[#allocation8 + $0x1d0] sm:$0xff]
    %v1039 = vld [vmem:[#allocation8 + $0x1d8] sm:$0xff]
    %v1040 = vld [vmem:[#allocation8 + $0x1e0] sm:$0xff]
    %v1041 = vld [vmem:[#allocation8 + $0x1e8] sm:$0xff]
    %v1042 = vld [vmem:[#allocation8 + $0x1f0] sm:$0xff]
    %v1043 = vld [vmem:[#allocation8 + $0x1f8] sm:$0xff]
    %v1044 = vld [vmem:[%s4] sm:$0x1]
    %v1046 = vperm.slane %v1044, 0
    %1048 = vmatpush.msra.mxu0 %v995
    %1049 = vmatpush.msra.mxu0 %v994
    %1050 = vmatpush.msra.mxu0 %v993
    %1051 = vmatpush.msra.mxu0 %v992
    %1052 = vmatpush.msra.mxu0 %v991
    %1053 = vmatpush.msra.mxu0 %v990
    %1054 = vmatpush.msra.mxu0 %v989
    %1055 = vmatpush.msra.mxu0 %v988
    %1056 = vmatpush.msra.mxu0 %v987
    %1057 = vmatpush.msra.mxu0 %v986
    %1058 = vmatpush.msra.mxu0 %v985
    %1059 = vmatpush.msra.mxu0 %v984
    %1060 = vmatpush.msra.mxu0 %v983
    %1061 = vmatpush.msra.mxu0 %v982
    %1062 = vmatpush.msra.mxu0 %v981
    %1063 = vmatpush.msra.mxu0 %v980
    %1064 = vmatmul.f32.gmra.mxu0 %v964
    %v1065 = vpop.f32.mrf.mxu0
    %v1066 = vadd.f32 %v1046, %v1065
    %1067 = vmatmul.f32.gmra.mxu0 %v968
    %v1068 = vpop.f32.mrf.mxu0
    %v1069 = vadd.f32 %v1046, %v1068
    %1070 = vmatmul.f32.gmra.mxu0 %v972
    %v1071 = vpop.f32.mrf.mxu0
    %v1072 = vadd.f32 %v1046, %v1071
    %1073 = vmatmul.f32.gmra.mxu0 %v976
    %v1074 = vpop.f32.mrf.mxu0
    %v1075 = vadd.f32 %v1046, %v1074
    %1076 = vdwg.mxu0
    %1077 = vmatpush.msra.mxu0 %v1011
    %1078 = vmatpush.msra.mxu0 %v1010
    %1079 = vmatpush.msra.mxu0 %v1009
    %1080 = vmatpush.msra.mxu0 %v1008
    %1081 = vmatpush.msra.mxu0 %v1007
    %1082 = vmatpush.msra.mxu0 %v1006
    %1083 = vmatpush.msra.mxu0 %v1005
    %1084 = vmatpush.msra.mxu0 %v1004
    %1085 = vmatpush.msra.mxu0 %v1003
    %1086 = vmatpush.msra.mxu0 %v1002
    %1087 = vmatpush.msra.mxu0 %v1001
    %1088 = vmatpush.msra.mxu0 %v1000
    %1089 = vmatpush.msra.mxu0 %v999
    %1090 = vmatpush.msra.mxu0 %v998
    %1091 = vmatpush.msra.mxu0 %v997
    %1092 = vmatpush.msra.mxu0 %v996
    %1093 = vmatmul.f32.gmra.mxu0 %v965
    %v1094 = vpop.f32.mrf.mxu0
    %v1095 = vadd.f32 %v1066, %v1094
    %1096 = vmatmul.f32.gmra.mxu0 %v969
    %v1097 = vpop.f32.mrf.mxu0
    %v1098 = vadd.f32 %v1069, %v1097
    %1099 = vmatmul.f32.gmra.mxu0 %v973
    %v1100 = vpop.f32.mrf.mxu0
    %v1101 = vadd.f32 %v1072, %v1100
    %1102 = vmatmul.f32.gmra.mxu0 %v977
    %v1103 = vpop.f32.mrf.mxu0
    %v1104 = vadd.f32 %v1075, %v1103
    %1105 = vdwg.mxu0
    %1106 = vmatpush.msra.mxu0 %v1027
    %1107 = vmatpush.msra.mxu0 %v1026
    %1108 = vmatpush.msra.mxu0 %v1025
    %1109 = vmatpush.msra.mxu0 %v1024
    %1110 = vmatpush.msra.mxu0 %v1023
    %1111 = vmatpush.msra.mxu0 %v1022
    %1112 = vmatpush.msra.mxu0 %v1021
    %1113 = vmatpush.msra.mxu0 %v1020
    %1114 = vmatpush.msra.mxu0 %v1019
    %1115 = vmatpush.msra.mxu0 %v1018
    %1116 = vmatpush.msra.mxu0 %v1017
    %1117 = vmatpush.msra.mxu0 %v1016
    %1118 = vmatpush.msra.mxu0 %v1015
    %1119 = vmatpush.msra.mxu0 %v1014
    %1120 = vmatpush.msra.mxu0 %v1013
    %1121 = vmatpush.msra.mxu0 %v1012
    %1122 = vmatmul.f32.gmra.mxu0 %v966
    %v1123 = vpop.f32.mrf.mxu0
    %v1124 = vadd.f32 %v1095, %v1123
    %1125 = vmatmul.f32.gmra.mxu0 %v970
    %v1126 = vpop.f32.mrf.mxu0
    %v1127 = vadd.f32 %v1098, %v1126
    %1128 = vmatmul.f32.gmra.mxu0 %v974
    %v1129 = vpop.f32.mrf.mxu0
    %v1130 = vadd.f32 %v1101, %v1129
    %1131 = vmatmul.f32.gmra.mxu0 %v978
    %v1132 = vpop.f32.mrf.mxu0
    %v1133 = vadd.f32 %v1104, %v1132
    %1134 = vdwg.mxu0
    %1135 = vmatpush.msra.mxu0 %v1043
    %1136 = vmatpush.msra.mxu0 %v1042
    %1137 = vmatpush.msra.mxu0 %v1041
    %1138 = vmatpush.msra.mxu0 %v1040
    %1139 = vmatpush.msra.mxu0 %v1039
    %1140 = vmatpush.msra.mxu0 %v1038
    %1141 = vmatpush.msra.mxu0 %v1037
    %1142 = vmatpush.msra.mxu0 %v1036
    %1143 = vmatpush.msra.mxu0 %v1035
    %1144 = vmatpush.msra.mxu0 %v1034
    %1145 = vmatpush.msra.mxu0 %v1033
    %1146 = vmatpush.msra.mxu0 %v1032
    %1147 = vmatpush.msra.mxu0 %v1031
    %1148 = vmatpush.msra.mxu0 %v1030
    %1149 = vmatpush.msra.mxu0 %v1029
    %1150 = vmatpush.msra.mxu0 %v1028
    %1151 = vmatmul.f32.gmra.mxu0 %v967
    %v1152 = vpop.f32.mrf.mxu0
    %v1153 = vadd.f32 %v1124, %v1152
    %1154 = vmatmul.f32.gmra.mxu0 %v971
    %v1155 = vpop.f32.mrf.mxu0
    %v1156 = vadd.f32 %v1127, %v1155
    %1157 = vmatmul.f32.gmra.mxu0 %v975
    %v1158 = vpop.f32.mrf.mxu0
    %v1159 = vadd.f32 %v1130, %v1158
    %1160 = vmatmul.f32.gmra.mxu0 %v979
    %v1161 = vpop.f32.mrf.mxu0
    %v1162 = vadd.f32 %v1133, %v1161
    %1163 = vdwg.mxu0
    %1164 = vst [vmem:[#allocation10] sm:$0xff] %v1153
    %1165 = vst [vmem:[#allocation10 + $0x8] sm:$0xff] %v1156
    %1166 = vst [vmem:[#allocation10 + $0x10] sm:$0xff] %v1159
    %1167 = vst [vmem:[#allocation10 + $0x18] sm:$0xff] %v1162
    // Predicated region
    $region38: #{tpu_custom_call.1} parent=1 // pred_check
      _
    $region39: #{tpu_custom_call.1} parent=1 // pred_check_branch
      %1169 = sbr.rel (0) target = $region41
    $region40: #{tpu_custom_call.1} parent=1 // pred_region
      %1171 = vsyncadd [#allocation4], 0
      %s1172 = sshll.u32 [#allocation10], 4
      %s1173 = int_to_ptr.vmem [resolvable:$true] %s1172
      %s1174 = sshll.u32 %s5, 4
      %s1175 = int_to_ptr.hbm [resolvable:$true] %s1174
      %1180 = dma.vmem_to_hbm [thread:$0]  %s1173, 512, %s1175, [#allocation4], 128, 128, 8
    $region41: #{tpu_custom_call.1} parent=1 // pred_fallthru
      _
    // Predicated region
    $region42: #{tpu_custom_call.1} parent=1 // pred_check
      _
    $region43: #{tpu_custom_call.1} parent=1 // pred_check_branch
      %1182 = sbr.rel (0) target = $region45
    $region44: #{tpu_custom_call.1} parent=1 // pred_region
      %1184 = dma.done [#allocation4], 512
    $region45: #{tpu_custom_call.1} parent=1 // pred_fallthru
      _
    %1185 = vsyncpa [#allocation3], 1
    %1186 = vsyncpa [#allocation6], 1
    %1187 = vsyncpa [#allocation9], 1
    %1188 = vsyncpa [#allocation4], 1

</llo_original>
